<compile_context>
chip_gen: v7x
topology: tpu7x:2x2x1
jax: 0.10.0
libtpu: 0.0.40
codegen_flags: <defaults>
</compile_context>

<pallas_src>
import functools

import jax
import jax.numpy as jnp
from jax.experimental import pallas as pl
from jax.experimental.pallas import tpu as pltpu

HIDDEN_DIM = 64
H_PAD = 128    # hidden padded to a full 128-lane vreg / MXU width
OUT_PAD = 128  # fused (cont | cat) head compute width (lane-dense in VMEM)


def _round_up(x, m):
    return (x + m - 1) // m * m


def _cdiv(a, b):
    return (a + b - 1) // b


def _generator_kernel(z_ref, w1_ref, b1_ref, w2_ref, b2_ref, wh_ref, bh_ref,
                      out_ref):
    """Fused MLP forward: fc1 -> lrelu -> fc2 -> lrelu -> fused heads.

    All matmuls / activations run on full 128-lane tiles in VMEM; only the
    final HBM store is narrowed to the real (padded-to-8) head width.
    """
    # fc1 + leaky_relu(0.2)   (f32 accumulation regardless of weight dtype)
    z = z_ref[...].astype(w1_ref.dtype)
    h = jnp.dot(z, w1_ref[...], preferred_element_type=jnp.float32)
    h = h + b1_ref[...].astype(jnp.float32)
    h = jnp.where(h > 0, h, 0.2 * h)

    # fc2 + leaky_relu(0.2)
    h = jnp.dot(h.astype(w2_ref.dtype), w2_ref[...],
                preferred_element_type=jnp.float32)
    h = h + b2_ref[...].astype(jnp.float32)
    h = jnp.where(h > 0, h, 0.2 * h)

    # fused (continuous | categorical) head: 128-wide on the MXU ...
    out = jnp.dot(h.astype(wh_ref.dtype), wh_ref[...],
                  preferred_element_type=jnp.float32)
    out = out + bh_ref[...].astype(jnp.float32)
    # ... but only the real head columns (padded to 8) go back to HBM.
    head_pad = out_ref.shape[-1]
    out_ref[...] = out[:, :head_pad].astype(out_ref.dtype)


def pack_params(params, dtype=jnp.bfloat16):
    """Fuse the two heads and zero-pad hidden/output dims to 128 lanes.

    Input `params` holds the logical (unpadded, unfused) transposed weights
    ([in, out]) and [1, out] biases.  Returns the packed dict the kernel uses.
    bf16 (default) is safe on v5e/v6e/v7x: the MXU is bf16-native and all
    accumulation / VPU work stays f32.  Pass dtype=jnp.float32 for exactness.
    """
    latent_dim = params["w1"].shape[0]
    cont_dim = params["wc"].shape[1]
    num_classes = params["wk"].shape[1]
    head_dim = cont_dim + num_classes
    assert head_dim <= OUT_PAD, "fused head wider than one output slab"

    w1 = jnp.zeros((latent_dim, H_PAD), dtype).at[:, :HIDDEN_DIM].set(
        params["w1"].astype(dtype))
    b1 = jnp.zeros((1, H_PAD), dtype).at[:, :HIDDEN_DIM].set(
        params["b1"].astype(dtype))
    w2 = jnp.zeros((H_PAD, H_PAD), dtype).at[:HIDDEN_DIM, :HIDDEN_DIM].set(
        params["w2"].astype(dtype))
    b2 = jnp.zeros((1, H_PAD), dtype).at[:, :HIDDEN_DIM].set(
        params["b2"].astype(dtype))

    head_w = jnp.concatenate([params["wc"], params["wk"]], axis=1)  # [H, head]
    head_b = jnp.concatenate([params["bc"], params["bk"]], axis=1)  # [1, head]
    wh = jnp.zeros((H_PAD, OUT_PAD), dtype).at[:HIDDEN_DIM, :head_dim].set(
        head_w.astype(dtype))
    bh = jnp.zeros((1, OUT_PAD), dtype).at[:, :head_dim].set(
        head_b.astype(dtype))

    return {"w1": w1, "b1": b1, "w2": w2, "b2": b2, "wh": wh, "bh": bh}


@functools.partial(jax.jit,
                   static_argnames=("cont_dim", "num_classes", "batch_tile"))
def generator_forward(z, packed, *, cont_dim, num_classes, batch_tile=2048):
    """Run the fused generator forward pass.

    z: [B, latent_dim] float32; packed: output of pack_params().
    Returns (cont_out [B, cont_dim], cat_logits [B, num_classes]), float32.
    """
    B, latent_dim = z.shape
    head_dim = cont_dim + num_classes
    head_pad = _round_up(head_dim, 8)
    assert head_pad <= OUT_PAD

    # Batch tile: multiple of 8 sublanes, as large as the batch allows, but
    # capped so B > 8 yields at least 2 grid steps (v7x megacore sharding).
    bt = _round_up(min(batch_tile, B), 8)
    if B > 8:
        bt = min(bt, _round_up(_cdiv(B, 2), 8))
    num_tiles = _cdiv(B, bt)
    B_pad = num_tiles * bt
    if B_pad != B:
        z = jnp.pad(z, ((0, B_pad - B), (0, 0)))

    resident = lambda i: (0, 0)  # weights/biases stay in VMEM across the grid
    out = pl.pallas_call(
        _generator_kernel,
        out_shape=jax.ShapeDtypeStruct((B_pad, head_pad), jnp.float32),
        grid=(num_tiles,),
        in_specs=[
            pl.BlockSpec((bt, latent_dim), lambda i: (i, 0)),   # z tile
            pl.BlockSpec((latent_dim, H_PAD), resident),        # w1
            pl.BlockSpec((1, H_PAD), resident),                 # b1
            pl.BlockSpec((H_PAD, H_PAD), resident),             # w2
            pl.BlockSpec((1, H_PAD), resident),                 # b2
            pl.BlockSpec((H_PAD, OUT_PAD), resident),           # fused head W
            pl.BlockSpec((1, OUT_PAD), resident),               # fused head b
        ],
        out_specs=pl.BlockSpec((bt, head_pad), lambda i: (i, 0)),
        compiler_params=pltpu.CompilerParams(
            dimension_semantics=("parallel",)),
    )(z, packed["w1"], packed["b1"], packed["w2"], packed["b2"],
      packed["wh"], packed["bh"])

    cont_out = out[:B, :cont_dim]
    cat_logits = out[:B, cont_dim:cont_dim + num_classes]
    return cont_out, cat_logits


def init_params(key, latent_dim, cont_dim, num_classes):
    """nn.Linear-style init: U(-1/sqrt(fan_in), 1/sqrt(fan_in)); weights [in, out]."""
    def linear(k, fan_in, fan_out):
        kw, kb = jax.random.split(k)
        bound = 1.0 / jnp.sqrt(fan_in)
        w = jax.random.uniform(kw, (fan_in, fan_out), jnp.float32, -bound, bound)
        b = jax.random.uniform(kb, (1, fan_out), jnp.float32, -bound, bound)
        return w, b

    k1, k2, k3, k4 = jax.random.split(key, 4)
    w1, b1 = linear(k1, latent_dim, HIDDEN_DIM)
    w2, b2 = linear(k2, HIDDEN_DIM, HIDDEN_DIM)
    wc, bc = linear(k3, HIDDEN_DIM, cont_dim)
    wk, bk = linear(k4, HIDDEN_DIM, num_classes)
    return {"w1": w1, "b1": b1, "w2": w2, "b2": b2,
            "wc": wc, "bc": bc, "wk": wk, "bk": bk}


def _reference_forward(z, p):
    """Pure-JAX reference on the original (unfused, unpadded) params."""
    h = z @ p["w1"] + p["b1"]
    h = jnp.where(h > 0, h, 0.2 * h)
    h = h @ p["w2"] + p["b2"]
    h = jnp.where(h > 0, h, 0.2 * h)
    return h @ p["wc"] + p["bc"], h @ p["wk"] + p["bk"]


if __name__ == "__main__":
    latent_dim = 16
    cont_dim = 4
    num_classes = 3

    key = jax.random.PRNGKey(0)
    kz1, kz2, kz3, kp = jax.random.split(key, 4)

    params = init_params(kp, latent_dim, cont_dim, num_classes)
    packed_f32 = pack_params(params, jnp.float32)   # exact path for validation
    packed_bf16 = pack_params(params)               # default bf16 weights

    # Case 1: tiny batch (single grid step), f32 weights, tight tolerance.
    z_small = jax.random.normal(kz1, (8, latent_dim), jnp.float32)
    cont_s, cat_s = generator_forward(
        z_small, packed_f32, cont_dim=cont_dim, num_classes=num_classes)
    jax.block_until_ready((cont_s, cat_s))
    ref_cont_s, ref_cat_s = _reference_forward(z_small, params)
    assert cont_s.shape == (8, cont_dim)
    assert cat_s.shape == (8, num_classes)
    assert jnp.allclose(cont_s, ref_cont_s, atol=1e-5, rtol=1e-5)
    assert jnp.allclose(cat_s, ref_cat_s, atol=1e-5, rtol=1e-5)

    # Case 2: batched, non-multiple-of-tile (padding + multi-step grid), f32.
    z_big = jax.random.normal(kz2, (260, latent_dim), jnp.float32)
    cont_b, cat_b = generator_forward(
        z_big, packed_f32, cont_dim=cont_dim, num_classes=num_classes,
        batch_tile=128)
    jax.block_until_ready((cont_b, cat_b))
    ref_cont_b, ref_cat_b = _reference_forward(z_big, params)
    assert cont_b.shape == (260, cont_dim)
    assert cat_b.shape == (260, num_classes)
    assert jnp.allclose(cont_b, ref_cont_b, atol=1e-5, rtol=1e-5)
    assert jnp.allclose(cat_b, ref_cat_b, atol=1e-5, rtol=1e-5)

    # Case 3: default bf16 weights + default (large) batch tile; looser tol.
    z_bf = jax.random.normal(kz3, (300, latent_dim), jnp.float32)
    cont_h, cat_h = generator_forward(
        z_bf, packed_bf16, cont_dim=cont_dim, num_classes=num_classes)
    jax.block_until_ready((cont_h, cat_h))
    ref_cont_h, ref_cat_h = _reference_forward(z_bf, params)
    assert cont_h.shape == (300, cont_dim)
    assert cat_h.shape == (300, num_classes)
    assert jnp.allclose(cont_h, ref_cont_h, atol=5e-2, rtol=5e-2)
    assert jnp.allclose(cat_h, ref_cat_h, atol=5e-2, rtol=5e-2)

    print("KERNEL_OK")
</pallas_src>

<mosaic_0001>
module attributes {stable_mosaic.version = 11 : i64} {
  func.func @_generator_kernel(%arg0: i32, %arg1: memref<8x16xf32, #tpu.memory_space<vmem>>, %arg2: memref<16x128xf32, #tpu.memory_space<vmem>>, %arg3: memref<1x128xf32, #tpu.memory_space<vmem>>, %arg4: memref<128x128xf32, #tpu.memory_space<vmem>>, %arg5: memref<1x128xf32, #tpu.memory_space<vmem>>, %arg6: memref<128x128xf32, #tpu.memory_space<vmem>>, %arg7: memref<1x128xf32, #tpu.memory_space<vmem>>, %arg8: memref<8x8xf32, #tpu.memory_space<vmem>>) attributes {dimension_semantics = [#tpu.dimension_semantics<parallel>], iteration_bounds = array<i64: 1>, scalar_prefetch = 0 : i64, scratch_operands = 0 : i64, tpu.core_type = #tpu.core_type<tc>, window_params = [{transform_indices = @transform_0, window_bounds = array<i64: 8, 16>}, {pipeline_mode = #tpu.pipeline_mode<synchronous>, transform_indices = @transform_1, window_bounds = array<i64: 16, 128>}, {pipeline_mode = #tpu.pipeline_mode<synchronous>, transform_indices = @transform_2, window_bounds = array<i64: 1, 128>}, {pipeline_mode = #tpu.pipeline_mode<synchronous>, transform_indices = @transform_3, window_bounds = array<i64: 128, 128>}, {pipeline_mode = #tpu.pipeline_mode<synchronous>, transform_indices = @transform_4, window_bounds = array<i64: 1, 128>}, {pipeline_mode = #tpu.pipeline_mode<synchronous>, transform_indices = @transform_5, window_bounds = array<i64: 128, 128>}, {pipeline_mode = #tpu.pipeline_mode<synchronous>, transform_indices = @transform_6, window_bounds = array<i64: 1, 128>}, {transform_indices = @transform_7, window_bounds = array<i64: 8, 8>}]} {
    %c0 = arith.constant 0 : index
    %c0_0 = arith.constant 0 : index
    %0 = vector.load %arg1[%c0, %c0_0] : memref<8x16xf32, #tpu.memory_space<vmem>>, vector<8x16xf32>
    %c0_1 = arith.constant 0 : index
    %c0_2 = arith.constant 0 : index
    %1 = vector.load %arg2[%c0_1, %c0_2] : memref<16x128xf32, #tpu.memory_space<vmem>>, vector<16x128xf32>
    %cst = arith.constant dense<0.000000e+00> : vector<8x128xf32>
    %2 = tpu.matmul %0, %1, %cst {dimension_numbers = #tpu.dot_dimension_numbers<[1], [0], [0], [1], [0, 0, 1, 1], [], []>} : vector<8x16xf32>, vector<16x128xf32>, vector<8x128xf32> -> vector<8x128xf32>
    %c0_3 = arith.constant 0 : index
    %c0_4 = arith.constant 0 : index
    %3 = vector.load %arg3[%c0_3, %c0_4] : memref<1x128xf32, #tpu.memory_space<vmem>>, vector<1x128xf32>
    %4 = vector.broadcast %3 : vector<1x128xf32> to vector<8x128xf32>
    %5 = arith.addf %2, %4 : vector<8x128xf32>
    %cst_5 = arith.constant 0.000000e+00 : f32
    %6 = vector.broadcast %cst_5 : f32 to vector<8x128xf32>
    %7 = arith.cmpf ogt, %5, %6 : vector<8x128xf32>
    %cst_6 = arith.constant 2.000000e-01 : f32
    %8 = vector.broadcast %cst_6 : f32 to vector<8x128xf32>
    %9 = arith.mulf %8, %5 : vector<8x128xf32>
    %10 = arith.select %7, %5, %9 : vector<8x128xi1>, vector<8x128xf32>
    %c0_7 = arith.constant 0 : index
    %c0_8 = arith.constant 0 : index
    %11 = vector.load %arg4[%c0_7, %c0_8] : memref<128x128xf32, #tpu.memory_space<vmem>>, vector<128x128xf32>
    %cst_9 = arith.constant dense<0.000000e+00> : vector<8x128xf32>
    %12 = tpu.matmul %10, %11, %cst_9 {dimension_numbers = #tpu.dot_dimension_numbers<[1], [0], [0], [1], [0, 0, 1, 1], [], []>} : vector<8x128xf32>, vector<128x128xf32>, vector<8x128xf32> -> vector<8x128xf32>
    %c0_10 = arith.constant 0 : index
    %c0_11 = arith.constant 0 : index
    %13 = vector.load %arg5[%c0_10, %c0_11] : memref<1x128xf32, #tpu.memory_space<vmem>>, vector<1x128xf32>
    %14 = vector.broadcast %13 : vector<1x128xf32> to vector<8x128xf32>
    %15 = arith.addf %12, %14 : vector<8x128xf32>
    %cst_12 = arith.constant 0.000000e+00 : f32
    %16 = vector.broadcast %cst_12 : f32 to vector<8x128xf32>
    %17 = arith.cmpf ogt, %15, %16 : vector<8x128xf32>
    %cst_13 = arith.constant 2.000000e-01 : f32
    %18 = vector.broadcast %cst_13 : f32 to vector<8x128xf32>
    %19 = arith.mulf %18, %15 : vector<8x128xf32>
    %20 = arith.select %17, %15, %19 : vector<8x128xi1>, vector<8x128xf32>
    %c0_14 = arith.constant 0 : index
    %c0_15 = arith.constant 0 : index
    %21 = vector.load %arg6[%c0_14, %c0_15] : memref<128x128xf32, #tpu.memory_space<vmem>>, vector<128x128xf32>
    %cst_16 = arith.constant dense<0.000000e+00> : vector<8x128xf32>
    %22 = tpu.matmul %20, %21, %cst_16 {dimension_numbers = #tpu.dot_dimension_numbers<[1], [0], [0], [1], [0, 0, 1, 1], [], []>} : vector<8x128xf32>, vector<128x128xf32>, vector<8x128xf32> -> vector<8x128xf32>
    %c0_17 = arith.constant 0 : index
    %c0_18 = arith.constant 0 : index
    %23 = vector.load %arg7[%c0_17, %c0_18] : memref<1x128xf32, #tpu.memory_space<vmem>>, vector<1x128xf32>
    %24 = vector.broadcast %23 : vector<1x128xf32> to vector<8x128xf32>
    %25 = arith.addf %22, %24 : vector<8x128xf32>
    %26 = vector.extract_strided_slice %25 {offsets = [0, 0], sizes = [8, 8], strides = [1, 1]} : vector<8x128xf32> to vector<8x8xf32>
    %c0_19 = arith.constant 0 : index
    %c0_20 = arith.constant 0 : index
    %27 = vector.load %arg8[%c0_19, %c0_20] : memref<8x8xf32, #tpu.memory_space<vmem>>, vector<8x8xf32>
    tpu.vector_store %arg8[%c0_19, %c0_20], %26 {strides = array<i32>} : memref<8x8xf32, #tpu.memory_space<vmem>>, vector<8x8xf32>,
    return
  }
  func.func @transform_0(%arg0: i32) -> (i32, i32) {
    %c0_i32 = arith.constant 0 : i32
    %c0_i32_0 = arith.constant 0 : i32
    return %arg0, %c0_i32 : i32, i32
  }
  func.func @transform_1(%arg0: i32) -> (i32, i32) {
    %c0_i32 = arith.constant 0 : i32
    %c0_i32_0 = arith.constant 0 : i32
    %c0_i32_1 = arith.constant 0 : i32
    return %c0_i32, %c0_i32_0 : i32, i32
  }
  func.func @transform_2(%arg0: i32) -> (i32, i32) {
    %c0_i32 = arith.constant 0 : i32
    %c0_i32_0 = arith.constant 0 : i32
    %c0_i32_1 = arith.constant 0 : i32
    return %c0_i32, %c0_i32_0 : i32, i32
  }
  func.func @transform_3(%arg0: i32) -> (i32, i32) {
    %c0_i32 = arith.constant 0 : i32
    %c0_i32_0 = arith.constant 0 : i32
    %c0_i32_1 = arith.constant 0 : i32
    return %c0_i32, %c0_i32_0 : i32, i32
  }
  func.func @transform_4(%arg0: i32) -> (i32, i32) {
    %c0_i32 = arith.constant 0 : i32
    %c0_i32_0 = arith.constant 0 : i32
    %c0_i32_1 = arith.constant 0 : i32
    return %c0_i32, %c0_i32_0 : i32, i32
  }
  func.func @transform_5(%arg0: i32) -> (i32, i32) {
    %c0_i32 = arith.constant 0 : i32
    %c0_i32_0 = arith.constant 0 : i32
    %c0_i32_1 = arith.constant 0 : i32
    return %c0_i32, %c0_i32_0 : i32, i32
  }
  func.func @transform_6(%arg0: i32) -> (i32, i32) {
    %c0_i32 = arith.constant 0 : i32
    %c0_i32_0 = arith.constant 0 : i32
    %c0_i32_1 = arith.constant 0 : i32
    return %c0_i32, %c0_i32_0 : i32, i32
  }
  func.func @transform_7(%arg0: i32) -> (i32, i32) {
    %c0_i32 = arith.constant 0 : i32
    %c0_i32_0 = arith.constant 0 : i32
    return %arg0, %c0_i32 : i32, i32
  }
}

</mosaic_0001>

<llo_original>
// kernel: generator_forward.1
$region0: #{generator_forward.1}
  #allocation0 [shape = 'u32[]', space=smem, size = 0x4, offset = 0x4, fixed_abs, tag = 'smem constant byte address 0x4 - core index']
  #allocation1 [shape = 'u32[144,128]{1,0:T(1,128)}', space=vmem, size = 0x12000, scoped, tag = 'internal scratch']
  %s0 = inlined_call_operand.hbm [shape: f32[8,16], index: 0, kind: input, shape index: {}]
  %s1 = inlined_call_operand.hbm [shape: f32[16,128], index: 1, kind: input, shape index: {}]
  %s2 = inlined_call_operand.vmem [shape: f32[1,128], index: 2, kind: input, shape index: {}]
  %s3 = inlined_call_operand.hbm [shape: f32[128,128], index: 3, kind: input, shape index: {}]
  %s4 = inlined_call_operand.vmem [shape: f32[1,128], index: 4, kind: input, shape index: {}]
  %s5 = inlined_call_operand.hbm [shape: f32[128,128], index: 5, kind: input, shape index: {}]
  %s6 = inlined_call_operand.vmem [shape: f32[1,128], index: 6, kind: input, shape index: {}]
  %s7 = inlined_call_operand.vmem [shape: f32[8,8], index: 7, kind: output, shape index: {}]
  %s8 = sld [smem:[#allocation0]]
  $region54: #{generator_forward.1} parent=0
    _
  %s10 = ssub.s32 1, %s8
  %s11 = scalar_select 0, %s10, %s8
  $region1: #{generator_forward.1} parent=0
    #allocation2 [shape = 'u8[4096]{0}', space=vmem, size = 0x1000, scoped, tag = 'input window, operand 0, single buffered']
    #allocation3 [shape = 's32[1]{0}', space=sflag, size = 0x4, scoped, tag = 'scoped memory for generator_forward.1']
    #allocation4 [shape = 'u8[8192]{0}', space=vmem, size = 0x2000, scoped, tag = 'input window, operand 1, single buffered']
    #allocation5 [shape = 's32[1]{0}', space=sflag, size = 0x4, scoped, tag = 'scoped memory for generator_forward.1']
    #allocation6 [shape = 'u8[65536]{0}', space=vmem, size = 0x10000, scoped, tag = 'input window, operand 3, single buffered']
    #allocation7 [shape = 'u8[65536]{0}', space=vmem, size = 0x10000, scoped, tag = 'input window, operand 5, single buffered']
    #allocation8 [shape = 's32[1]{0}', space=sflag, size = 0x4, scoped, tag = 'scoped memory for generator_forward.1']
    %12 = vsyncpa [#allocation3], 0
    %13 = vsyncpa [#allocation5], 0
    %14 = vsyncpa [#allocation8], 0
    // Predicated region
    $region2: #{generator_forward.1} parent=1 // pred_check
      _
    $region3: #{generator_forward.1} parent=1 // pred_check_branch
      %16 = sbr.rel (0) target = $region5
    $region4: #{generator_forward.1} parent=1 // pred_region
      %s18 = ssub.s32 128, 128
      %19 = vsyncadd [#allocation3], %s18
      %s21 = sshll.u32 [#allocation2], 4
      %s22 = int_to_ptr.vmem [resolvable:$true] %s21
      %24 = dma.hbm_to_vmem [thread:$0]  %s0, 128, %s22, [#allocation3]
    $region5: #{generator_forward.1} parent=1 // pred_fallthru
      _
    // Predicated region
    $region6: #{generator_forward.1} parent=1 // pred_check
      _
    $region7: #{generator_forward.1} parent=1 // pred_check_branch
      %26 = sbr.rel (0) target = $region9
    $region8: #{generator_forward.1} parent=1 // pred_region
      %s28 = ssub.s32 256, 256
      %29 = vsyncadd [#allocation5], %s28
      %s30 = sshll.u32 [#allocation4], 4
      %s31 = int_to_ptr.vmem [resolvable:$true] %s30
      %36 = dma.hbm_to_vmem [thread:$0]  %s1, 256, %s31, [#allocation5], 128, 128, 8
    $region9: #{generator_forward.1} parent=1 // pred_fallthru
      _
    // Predicated region
    $region10: #{generator_forward.1} parent=1 // pred_check
      _
    $region11: #{generator_forward.1} parent=1 // pred_check_branch
      %38 = sbr.rel (0) target = $region13
    $region12: #{generator_forward.1} parent=1 // pred_region
      _
    $region13: #{generator_forward.1} parent=1 // pred_fallthru
      _
    // Predicated region
    $region14: #{generator_forward.1} parent=1 // pred_check
      _
    $region15: #{generator_forward.1} parent=1 // pred_check_branch
      %40 = sbr.rel (0) target = $region17
    $region16: #{generator_forward.1} parent=1 // pred_region
      %s42 = ssub.s32 2048, 2048
      %43 = vsyncadd [#allocation5], %s42
      %s44 = sshll.u32 [#allocation6], 4
      %s45 = int_to_ptr.vmem [resolvable:$true] %s44
      %50 = dma.hbm_to_vmem [thread:$0]  %s3, 2048, %s45, [#allocation5], 128, 128, 8
    $region17: #{generator_forward.1} parent=1 // pred_fallthru
      _
    // Predicated region
    $region18: #{generator_forward.1} parent=1 // pred_check
      _
    $region19: #{generator_forward.1} parent=1 // pred_check_branch
      %52 = sbr.rel (0) target = $region21
    $region20: #{generator_forward.1} parent=1 // pred_region
      _
    $region21: #{generator_forward.1} parent=1 // pred_fallthru
      _
    // Predicated region
    $region22: #{generator_forward.1} parent=1 // pred_check
      _
    $region23: #{generator_forward.1} parent=1 // pred_check_branch
      %54 = sbr.rel (0) target = $region25
    $region24: #{generator_forward.1} parent=1 // pred_region
      %s56 = ssub.s32 2048, 2048
      %57 = vsyncadd [#allocation8], %s56
      %s58 = sshll.u32 [#allocation7], 4
      %s59 = int_to_ptr.vmem [resolvable:$true] %s58
      %64 = dma.hbm_to_vmem [thread:$0]  %s5, 2048, %s59, [#allocation8], 128, 128, 8
    $region25: #{generator_forward.1} parent=1 // pred_fallthru
      _
    // Predicated region
    $region26: #{generator_forward.1} parent=1 // pred_check
      _
    $region27: #{generator_forward.1} parent=1 // pred_check_branch
      %66 = sbr.rel (0) target = $region29
    $region28: #{generator_forward.1} parent=1 // pred_region
      _
    $region29: #{generator_forward.1} parent=1 // pred_fallthru
      _
    // Predicated region
    $region30: #{generator_forward.1} parent=1 // pred_check
      _
    $region31: #{generator_forward.1} parent=1 // pred_check_branch
      %68 = sbr.rel (0) target = $region33
    $region32: #{generator_forward.1} parent=1 // pred_region
      %69 = dma.done [#allocation3], 128
    $region33: #{generator_forward.1} parent=1 // pred_fallthru
      _
    // Predicated region
    $region34: #{generator_forward.1} parent=1 // pred_check
      _
    $region35: #{generator_forward.1} parent=1 // pred_check_branch
      %71 = sbr.rel (0) target = $region37
    $region36: #{generator_forward.1} parent=1 // pred_region
      %72 = dma.done [#allocation5], 256
    $region37: #{generator_forward.1} parent=1 // pred_fallthru
      _
    // Predicated region
    $region38: #{generator_forward.1} parent=1 // pred_check
      _
    $region39: #{generator_forward.1} parent=1 // pred_check_branch
      %74 = sbr.rel (0) target = $region41
    $region40: #{generator_forward.1} parent=1 // pred_region
      %75 = dma.done [#allocation5], 2048
    $region41: #{generator_forward.1} parent=1 // pred_fallthru
      _
    // Predicated region
    $region42: #{generator_forward.1} parent=1 // pred_check
      _
    $region43: #{generator_forward.1} parent=1 // pred_check_branch
      %77 = sbr.rel (0) target = $region45
    $region44: #{generator_forward.1} parent=1 // pred_region
      %78 = dma.done [#allocation8], 2048
    $region45: #{generator_forward.1} parent=1 // pred_fallthru
      _
    %v79 = vld [vmem:[#allocation2] sm:$0xff]
    %v80 = vld [vmem:[#allocation4] sm:$0xff]
    %v81 = vld [vmem:[#allocation4 + $0x8] sm:$0xff]
    %v82 = vld [vmem:[%s2] sm:$0x1]
    %v84 = vlaneseq
    %v85 = vshrl.u32 %v84, 7
    %v86 = vsub.s32 0, %v85
    %v87 = vrot.slane %v82, %v86
    %vm89 = vcmask 130048
    %v91 = vsel %vm89, %v79, 0
    %93 = vmatprep.subr.mxu0 0.0
    %94 = vmatpush1.msra.mxu0 %v80
    %95 = vmatprep.subr.mxu0 0.0
    %96 = vmatpush1.msra.mxu0 %v81
    %97 = vmatprep.subr.mxu0 0.0
    %98 = vmatpush1.msra.mxu0 0.0
    %99 = vmatprep.subr.mxu0 0.0
    %100 = vmatpush1.msra.mxu0 0.0
    %101 = vmatprep.subr.mxu0 0.0
    %102 = vmatpush1.msra.mxu0 0.0
    %103 = vmatprep.subr.mxu0 0.0
    %104 = vmatpush1.msra.mxu0 0.0
    %105 = vmatprep.subr.mxu0 0.0
    %106 = vmatpush1.msra.mxu0 0.0
    %107 = vmatprep.subr.mxu0 0.0
    %108 = vmatpush1.msra.mxu0 0.0
    %109 = vmatprep.subr.mxu0 0.0
    %110 = vmatpush1.msra.mxu0 0.0
    %111 = vmatprep.subr.mxu0 0.0
    %112 = vmatpush1.msra.mxu0 0.0
    %113 = vmatprep.subr.mxu0 0.0
    %114 = vmatpush1.msra.mxu0 0.0
    %115 = vmatprep.subr.mxu0 0.0
    %116 = vmatpush1.msra.mxu0 0.0
    %117 = vmatprep.subr.mxu0 0.0
    %118 = vmatpush1.msra.mxu0 0.0
    %119 = vmatprep.subr.mxu0 0.0
    %120 = vmatpush1.msra.mxu0 0.0
    %121 = vmatprep.subr.mxu0 0.0
    %122 = vmatpush1.msra.mxu0 0.0
    %123 = vmatprep.subr.mxu0 0.0
    %124 = vmatpush1.msra.mxu0 0.0
    %125 = vmatprep.subr.mxu0 0.0
    %126 = vmatpush1.msra.mxu0 0.0
    %127 = vmatprep.subr.mxu0 0.0
    %128 = vmatpush1.msra.mxu0 0.0
    %129 = vmatprep.subr.mxu0 0.0
    %130 = vmatpush1.msra.mxu0 0.0
    %131 = vmatprep.subr.mxu0 0.0
    %132 = vmatpush1.msra.mxu0 0.0
    %133 = vmatprep.subr.mxu0 0.0
    %134 = vmatpush1.msra.mxu0 0.0
    %135 = vmatprep.subr.mxu0 0.0
    %136 = vmatpush1.msra.mxu0 0.0
    %137 = vmatprep.subr.mxu0 0.0
    %138 = vmatpush1.msra.mxu0 0.0
    %139 = vmatprep.subr.mxu0 0.0
    %140 = vmatpush1.msra.mxu0 0.0
    %141 = vmatprep.subr.mxu0 0.0
    %142 = vmatpush1.msra.mxu0 0.0
    %143 = vmatprep.subr.mxu0 0.0
    %144 = vmatpush1.msra.mxu0 0.0
    %145 = vmatprep.subr.mxu0 0.0
    %146 = vmatpush1.msra.mxu0 0.0
    %147 = vmatprep.subr.mxu0 0.0
    %148 = vmatpush1.msra.mxu0 0.0
    %149 = vmatprep.subr.mxu0 0.0
    %150 = vmatpush1.msra.mxu0 0.0
    %151 = vmatprep.subr.mxu0 0.0
    %152 = vmatpush1.msra.mxu0 0.0
    %153 = vmatprep.subr.mxu0 0.0
    %154 = vmatpush1.msra.mxu0 0.0
    %155 = vmatprep.subr.mxu0 0.0
    %156 = vmatpush1.msra.mxu0 0.0
    %157 = vmatprep.mubr.f32.mxu0 0.0
    %158 = vmatmul.mubr.f32.gmra.mrb[0].mxu0 %v91
    %v159 = vpop.f32.mrb[0].mxu0
    %v160 = vadd.f32 %v87, %v159
    %v161 = vpop.f32.mrb[0].mxu0
    %162 = vdwg.mxu0
    %vm163 = vcmp.gt.f32.partialorder %v160, 0.0
    %v164 = vmul.f32 %v160, 0.2
    %v165 = vsel %vm163, %v160, %v164
    %v166 = vld [vmem:[#allocation6] sm:$0xff]
    %v167 = vld [vmem:[#allocation6 + $0x8] sm:$0xff]
    %v168 = vld [vmem:[#allocation6 + $0x10] sm:$0xff]
    %v169 = vld [vmem:[#allocation6 + $0x18] sm:$0xff]
    %v170 = vld [vmem:[#allocation6 + $0x20] sm:$0xff]
    %v171 = vld [vmem:[#allocation6 + $0x28] sm:$0xff]
    %v172 = vld [vmem:[#allocation6 + $0x30] sm:$0xff]
    %v173 = vld [vmem:[#allocation6 + $0x38] sm:$0xff]
    %v174 = vld [vmem:[#allocation6 + $0x40] sm:$0xff]
    %v175 = vld [vmem:[#allocation6 + $0x48] sm:$0xff]
    %v176 = vld [vmem:[#allocation6 + $0x50] sm:$0xff]
    %v177 = vld [vmem:[#allocation6 + $0x58] sm:$0xff]
    %v178 = vld [vmem:[#allocation6 + $0x60] sm:$0xff]
    %v179 = vld [vmem:[#allocation6 + $0x68] sm:$0xff]
    %v180 = vld [vmem:[#allocation6 + $0x70] sm:$0xff]
    %v181 = vld [vmem:[#allocation6 + $0x78] sm:$0xff]
    %v182 = vld [vmem:[%s4] sm:$0x1]
    %v184 = vlaneseq
    %v185 = vshrl.u32 %v184, 7
    %v186 = vsub.s32 0, %v185
    %v187 = vrot.slane %v182, %v186
    %189 = vmatprep.subr.mxu0 0.0
    %190 = vmatpush1.msra.mxu0 %v166
    %191 = vmatprep.subr.mxu0 0.0
    %192 = vmatpush1.msra.mxu0 %v167
    %193 = vmatprep.subr.mxu0 0.0
    %194 = vmatpush1.msra.mxu0 %v168
    %195 = vmatprep.subr.mxu0 0.0
    %196 = vmatpush1.msra.mxu0 %v169
    %197 = vmatprep.subr.mxu0 0.0
    %198 = vmatpush1.msra.mxu0 %v170
    %199 = vmatprep.subr.mxu0 0.0
    %200 = vmatpush1.msra.mxu0 %v171
    %201 = vmatprep.subr.mxu0 0.0
    %202 = vmatpush1.msra.mxu0 %v172
    %203 = vmatprep.subr.mxu0 0.0
    %204 = vmatpush1.msra.mxu0 %v173
    %205 = vmatprep.subr.mxu0 0.0
    %206 = vmatpush1.msra.mxu0 %v174
    %207 = vmatprep.subr.mxu0 0.0
    %208 = vmatpush1.msra.mxu0 %v175
    %209 = vmatprep.subr.mxu0 0.0
    %210 = vmatpush1.msra.mxu0 %v176
    %211 = vmatprep.subr.mxu0 0.0
    %212 = vmatpush1.msra.mxu0 %v177
    %213 = vmatprep.subr.mxu0 0.0
    %214 = vmatpush1.msra.mxu0 %v178
    %215 = vmatprep.subr.mxu0 0.0
    %216 = vmatpush1.msra.mxu0 %v179
    %217 = vmatprep.subr.mxu0 0.0
    %218 = vmatpush1.msra.mxu0 %v180
    %219 = vmatprep.subr.mxu0 0.0
    %220 = vmatpush1.msra.mxu0 %v181
    %221 = vmatprep.subr.mxu0 0.0
    %222 = vmatpush1.msra.mxu0 0.0
    %223 = vmatprep.subr.mxu0 0.0
    %224 = vmatpush1.msra.mxu0 0.0
    %225 = vmatprep.subr.mxu0 0.0
    %226 = vmatpush1.msra.mxu0 0.0
    %227 = vmatprep.subr.mxu0 0.0
    %228 = vmatpush1.msra.mxu0 0.0
    %229 = vmatprep.subr.mxu0 0.0
    %230 = vmatpush1.msra.mxu0 0.0
    %231 = vmatprep.subr.mxu0 0.0
    %232 = vmatpush1.msra.mxu0 0.0
    %233 = vmatprep.subr.mxu0 0.0
    %234 = vmatpush1.msra.mxu0 0.0
    %235 = vmatprep.subr.mxu0 0.0
    %236 = vmatpush1.msra.mxu0 0.0
    %237 = vmatprep.subr.mxu0 0.0
    %238 = vmatpush1.msra.mxu0 0.0
    %239 = vmatprep.subr.mxu0 0.0
    %240 = vmatpush1.msra.mxu0 0.0
    %241 = vmatprep.subr.mxu0 0.0
    %242 = vmatpush1.msra.mxu0 0.0
    %243 = vmatprep.subr.mxu0 0.0
    %244 = vmatpush1.msra.mxu0 0.0
    %245 = vmatprep.subr.mxu0 0.0
    %246 = vmatpush1.msra.mxu0 0.0
    %247 = vmatprep.subr.mxu0 0.0
    %248 = vmatpush1.msra.mxu0 0.0
    %249 = vmatprep.subr.mxu0 0.0
    %250 = vmatpush1.msra.mxu0 0.0
    %251 = vmatprep.subr.mxu0 0.0
    %252 = vmatpush1.msra.mxu0 0.0
    %253 = vmatprep.mubr.f32.mxu0 0.0
    %254 = vmatmul.mubr.f32.gmra.mrb[0].mxu0 %v165
    %v255 = vpop.f32.mrb[0].mxu0
    %v256 = vadd.f32 %v187, %v255
    %v257 = vpop.f32.mrb[0].mxu0
    %258 = vdwg.mxu0
    %vm259 = vcmp.gt.f32.partialorder %v256, 0.0
    %v260 = vmul.f32 %v256, 0.2
    %v261 = vsel %vm259, %v256, %v260
    %v262 = vld [vmem:[#allocation7] sm:$0xff]
    %v263 = vld [vmem:[#allocation7 + $0x8] sm:$0xff]
    %v264 = vld [vmem:[#allocation7 + $0x10] sm:$0xff]
    %v265 = vld [vmem:[#allocation7 + $0x18] sm:$0xff]
    %v266 = vld [vmem:[#allocation7 + $0x20] sm:$0xff]
    %v267 = vld [vmem:[#allocation7 + $0x28] sm:$0xff]
    %v268 = vld [vmem:[#allocation7 + $0x30] sm:$0xff]
    %v269 = vld [vmem:[#allocation7 + $0x38] sm:$0xff]
    %v270 = vld [vmem:[#allocation7 + $0x40] sm:$0xff]
    %v271 = vld [vmem:[#allocation7 + $0x48] sm:$0xff]
    %v272 = vld [vmem:[#allocation7 + $0x50] sm:$0xff]
    %v273 = vld [vmem:[#allocation7 + $0x58] sm:$0xff]
    %v274 = vld [vmem:[#allocation7 + $0x60] sm:$0xff]
    %v275 = vld [vmem:[#allocation7 + $0x68] sm:$0xff]
    %v276 = vld [vmem:[#allocation7 + $0x70] sm:$0xff]
    %v277 = vld [vmem:[#allocation7 + $0x78] sm:$0xff]
    %v278 = vld [vmem:[%s6] sm:$0x1]
    %v280 = vlaneseq
    %v281 = vshrl.u32 %v280, 7
    %v282 = vsub.s32 0, %v281
    %v283 = vrot.slane %v278, %v282
    %285 = vmatprep.subr.mxu0 0.0
    %286 = vmatpush1.msra.mxu0 %v262
    %287 = vmatprep.subr.mxu0 0.0
    %288 = vmatpush1.msra.mxu0 %v263
    %289 = vmatprep.subr.mxu0 0.0
    %290 = vmatpush1.msra.mxu0 %v264
    %291 = vmatprep.subr.mxu0 0.0
    %292 = vmatpush1.msra.mxu0 %v265
    %293 = vmatprep.subr.mxu0 0.0
    %294 = vmatpush1.msra.mxu0 %v266
    %295 = vmatprep.subr.mxu0 0.0
    %296 = vmatpush1.msra.mxu0 %v267
    %297 = vmatprep.subr.mxu0 0.0
    %298 = vmatpush1.msra.mxu0 %v268
    %299 = vmatprep.subr.mxu0 0.0
    %300 = vmatpush1.msra.mxu0 %v269
    %301 = vmatprep.subr.mxu0 0.0
    %302 = vmatpush1.msra.mxu0 %v270
    %303 = vmatprep.subr.mxu0 0.0
    %304 = vmatpush1.msra.mxu0 %v271
    %305 = vmatprep.subr.mxu0 0.0
    %306 = vmatpush1.msra.mxu0 %v272
    %307 = vmatprep.subr.mxu0 0.0
    %308 = vmatpush1.msra.mxu0 %v273
    %309 = vmatprep.subr.mxu0 0.0
    %310 = vmatpush1.msra.mxu0 %v274
    %311 = vmatprep.subr.mxu0 0.0
    %312 = vmatpush1.msra.mxu0 %v275
    %313 = vmatprep.subr.mxu0 0.0
    %314 = vmatpush1.msra.mxu0 %v276
    %315 = vmatprep.subr.mxu0 0.0
    %316 = vmatpush1.msra.mxu0 %v277
    %317 = vmatprep.subr.mxu0 0.0
    %318 = vmatpush1.msra.mxu0 0.0
    %319 = vmatprep.subr.mxu0 0.0
    %320 = vmatpush1.msra.mxu0 0.0
    %321 = vmatprep.subr.mxu0 0.0
    %322 = vmatpush1.msra.mxu0 0.0
    %323 = vmatprep.subr.mxu0 0.0
    %324 = vmatpush1.msra.mxu0 0.0
    %325 = vmatprep.subr.mxu0 0.0
    %326 = vmatpush1.msra.mxu0 0.0
    %327 = vmatprep.subr.mxu0 0.0
    %328 = vmatpush1.msra.mxu0 0.0
    %329 = vmatprep.subr.mxu0 0.0
    %330 = vmatpush1.msra.mxu0 0.0
    %331 = vmatprep.subr.mxu0 0.0
    %332 = vmatpush1.msra.mxu0 0.0
    %333 = vmatprep.subr.mxu0 0.0
    %334 = vmatpush1.msra.mxu0 0.0
    %335 = vmatprep.subr.mxu0 0.0
    %336 = vmatpush1.msra.mxu0 0.0
    %337 = vmatprep.subr.mxu0 0.0
    %338 = vmatpush1.msra.mxu0 0.0
    %339 = vmatprep.subr.mxu0 0.0
    %340 = vmatpush1.msra.mxu0 0.0
    %341 = vmatprep.subr.mxu0 0.0
    %342 = vmatpush1.msra.mxu0 0.0
    %343 = vmatprep.subr.mxu0 0.0
    %344 = vmatpush1.msra.mxu0 0.0
    %345 = vmatprep.subr.mxu0 0.0
    %346 = vmatpush1.msra.mxu0 0.0
    %347 = vmatprep.subr.mxu0 0.0
    %348 = vmatpush1.msra.mxu0 0.0
    %349 = vmatprep.mubr.f32.mxu0 0.0
    %350 = vmatmul.mubr.f32.gmra.mrb[0].mxu0 %v261
    %v351 = vpop.f32.mrb[0].mxu0
    %v352 = vadd.f32 %v283, %v351
    %v353 = vpop.f32.mrb[0].mxu0
    %354 = vdwg.mxu0
    %vm355 = vcmask 64512
    %356 = vst.msk [vmem:[%s7] sm:$0xff] %vm355, %v352
    // Predicated region
    $region46: #{generator_forward.1} parent=1 // pred_check
      _
    $region47: #{generator_forward.1} parent=1 // pred_check_branch
      %358 = sbr.rel (0) target = $region49
    $region48: #{generator_forward.1} parent=1 // pred_region
      _
    $region49: #{generator_forward.1} parent=1 // pred_fallthru
      _
    // Predicated region
    $region50: #{generator_forward.1} parent=1 // pred_check
      _
    $region51: #{generator_forward.1} parent=1 // pred_check_branch
      %360 = sbr.rel (0) target = $region53
    $region52: #{generator_forward.1} parent=1 // pred_region
      _
    $region53: #{generator_forward.1} parent=1 // pred_fallthru
      _
    %361 = vsyncpa [#allocation3], 1
    %362 = vsyncpa [#allocation5], 1
    %363 = vsyncpa [#allocation8], 1

</llo_original>
